<compile_context>
chip_gen: v5e
topology: v5e:2x2
jax: 0.10.0
libtpu: 0.0.40
codegen_flags: <defaults>
</compile_context>

<pallas_src>
import functools

import jax
import jax.numpy as jnp
from jax.experimental import pallas as pl
from jax.experimental.pallas import tpu as pltpu


def _tv_kernel(x_ref, hmask_ref, wmask_ref, out_ref, *,
               shift_h, shift_w, tb, n_rows, ragged):
    x = x_ref[...].astype(jnp.float32)                       # (tb, hw)

    if ragged:
        # Only the last block can read past the end of the (n, hw) input; those
        # rows are unspecified garbage, so zero them before any arithmetic.
        rows = jax.lax.broadcasted_iota(jnp.int32, (tb, 1), 0)
        valid = rows < (n_rows - pl.program_id(0) * tb)
        x = jnp.where(valid, x, 0.0)

    # roll(x, hw - s, axis=1)[j] == x[(j + s) % hw]  -> forward neighbour.
    dh = pltpu.roll(x, shift_h, 1) - x                       # x[j + W] - x[j]
    col_h = jnp.sum(dh * dh, axis=0, keepdims=True)          # (1, hw)
    dw = pltpu.roll(x, shift_w, 1) - x                       # x[j + 1] - x[j]
    col_w = jnp.sum(dw * dw, axis=0, keepdims=True)          # (1, hw)

    # Masks are 0 where the "neighbour" wrapped across a row/image boundary and
    # 1/count_{h,w} elsewhere, so this partial is already normalised.
    s = col_h * hmask_ref[...] + col_w * wmask_ref[...]      # (1, hw)
    out_ref[0] = jnp.sum(s, axis=1, keepdims=True)           # (1, 1) partial


def tv_loss(x, tvloss_weight=1.0, block_rows=None):
    """Exact equivalent of TVLoss(TVLoss_weight).forward(x) for NCHW x."""
    b, c, h, w = x.shape
    n, hw = b * c, h * w
    xf = x.reshape(n, hw)                                    # lane-dense view (contiguous)

    # --- block sizing: ~4 MiB of input data per step (dtype-aware), sublane
    # aligned.  No host-side padding: a ragged tail block is masked in-kernel.
    if block_rows is not None:
        tb = min(block_rows, n)
    else:
        target_elems = min(2 * 1024 * 1024,
                           max(1, (4 * 1024 * 1024) // x.dtype.itemsize))
        if n * hw <= target_elems:
            tb = n                                           # whole problem in one block
        else:
            tb = max(8, ((target_elems // hw) // 8) * 8)
            tb = min(tb, n)
    # TODO(synk): tile the H*W (lane) axis with a one-row halo when a single
    # slab exceeds the VMEM block budget (very large images on v7x's 64 MiB VMEM).
    grid = pl.cdiv(n, tb)
    ragged = (n % tb) != 0

    # --- resident masks (fetched once; also carry the 1/count normalisation).
    count_h = c * (h - 1) * w                                # numel(x[:, :, 1:, :]) / B
    count_w = c * h * (w - 1)                                # numel(x[:, :, :, 1:]) / B
    lane = jnp.arange(hw, dtype=jnp.int32)
    hmask = ((lane < (h - 1) * w).astype(jnp.float32) / count_h).reshape(1, hw)
    wmask = ((lane % w != w - 1).astype(jnp.float32) / count_w).reshape(1, hw)

    kernel = functools.partial(
        _tv_kernel,
        shift_h=(hw - w) % hw, shift_w=(hw - 1) % hw,
        tb=tb, n_rows=n, ragged=ragged)

    partials = pl.pallas_call(
        kernel,
        out_shape=jax.ShapeDtypeStruct((grid, 1, 1), jnp.float32),
        grid=(grid,),
        in_specs=[
            pl.BlockSpec((tb, hw), lambda i: (i, 0)),
            pl.BlockSpec((1, hw), lambda i: (0, 0)),
            pl.BlockSpec((1, hw), lambda i: (0, 0)),
        ],
        out_specs=pl.BlockSpec((1, 1, 1), lambda i: (i, 0, 0)),
        compiler_params=pltpu.CompilerParams(
            dimension_semantics=("parallel",),
            vmem_limit_bytes=48 * 1024 * 1024,
        ),
        cost_estimate=pl.CostEstimate(
            flops=6 * n * hw,
            transcendentals=0,
            bytes_accessed=n * hw * x.dtype.itemsize + 2 * hw * 4 + grid * 4,
        ),
    )(xf, hmask, wmask)

    return tvloss_weight * 2.0 * jnp.sum(partials) / b


def _tv_loss_ref(x, tvloss_weight=1.0):
    b, c, h, w = x.shape
    count_h = c * (h - 1) * w
    count_w = c * h * (w - 1)
    h_tv = jnp.sum((x[:, :, 1:, :] - x[:, :, :-1, :]) ** 2)
    w_tv = jnp.sum((x[:, :, :, 1:] - x[:, :, :, :-1]) ** 2)
    return tvloss_weight * 2.0 * (h_tv / count_h + w_tv / count_w) / b


if __name__ == "__main__":
    key = jax.random.PRNGKey(0)

    # Primary test (module-sized input), single block.
    x = jax.random.normal(key, (2, 4, 16, 16), dtype=jnp.float32)
    out = jax.block_until_ready(tv_loss(x, tvloss_weight=1.0))
    ref = jax.block_until_ready(_tv_loss_ref(x, tvloss_weight=1.0))
    assert out.shape == ()
    assert jnp.allclose(out, ref, rtol=1e-5, atol=1e-5), (out, ref)

    # Multi-block, parallel partial-sum path (n = 32, tb = 8, grid = 4).
    k1, k2 = jax.random.split(key)
    x2 = jax.random.normal(k1, (4, 8, 16, 16), dtype=jnp.float32)
    out2 = jax.block_until_ready(tv_loss(x2, tvloss_weight=0.5, block_rows=8))
    ref2 = jax.block_until_ready(_tv_loss_ref(x2, tvloss_weight=0.5))
    assert jnp.allclose(out2, ref2, rtol=1e-5, atol=1e-5), (out2, ref2)

    # Ragged tail path (n = 10, tb = 8 -> grid = 2 with in-kernel tail mask).
    x3 = jax.random.normal(k2, (2, 5, 16, 16), dtype=jnp.float32)
    out3 = jax.block_until_ready(tv_loss(x3, tvloss_weight=2.0, block_rows=8))
    ref3 = jax.block_until_ready(_tv_loss_ref(x3, tvloss_weight=2.0))
    assert jnp.allclose(out3, ref3, rtol=1e-5, atol=1e-5), (out3, ref3)

    print("KERNEL_OK")
</pallas_src>

<mosaic_0001>
module attributes {stable_mosaic.version = 11 : i64} {
  func.func @_tv_kernel(%arg0: i32, %arg1: memref<8x256xf32, #tpu.memory_space<vmem>>, %arg2: memref<1x256xf32, #tpu.memory_space<vmem>>, %arg3: memref<1x256xf32, #tpu.memory_space<vmem>>, %arg4: memref<1x1x1xf32, #tpu.memory_space<vmem>>) attributes {dimension_semantics = [#tpu.dimension_semantics<parallel>], iteration_bounds = array<i64: 1>, scalar_prefetch = 0 : i64, scratch_operands = 0 : i64, tpu.core_type = #tpu.core_type<tc>, window_params = [{transform_indices = @transform_0, window_bounds = array<i64: 8, 256>}, {pipeline_mode = #tpu.pipeline_mode<synchronous>, transform_indices = @transform_1, window_bounds = array<i64: 1, 256>}, {pipeline_mode = #tpu.pipeline_mode<synchronous>, transform_indices = @transform_2, window_bounds = array<i64: 1, 256>}, {transform_indices = @transform_3, window_bounds = array<i64: 1, 1, 1>}]} {
    %c0 = arith.constant 0 : index
    %c0_0 = arith.constant 0 : index
    %0 = vector.load %arg1[%c0, %c0_0] : memref<8x256xf32, #tpu.memory_space<vmem>>, vector<8x256xf32>
    %c240_i32 = arith.constant 240 : i32
    %1 = tpu.dynamic_rotate %0 by %c240_i32 dim 1 : vector<8x256xf32>, i32 -> vector<8x256xf32>
    %2 = arith.subf %1, %0 : vector<8x256xf32>
    %3 = arith.mulf %2, %2 : vector<8x256xf32>
    %cst = arith.constant dense<0.000000e+00> : vector<256xf32>
    %4 = vector.multi_reduction <add>, %3, %cst [0] : vector<8x256xf32> to vector<256xf32>
    %5 = vector.shape_cast %4 : vector<256xf32> to vector<1x256xf32>
    %c255_i32 = arith.constant 255 : i32
    %6 = tpu.dynamic_rotate %0 by %c255_i32 dim 1 : vector<8x256xf32>, i32 -> vector<8x256xf32>
    %7 = arith.subf %6, %0 : vector<8x256xf32>
    %8 = arith.mulf %7, %7 : vector<8x256xf32>
    %cst_1 = arith.constant dense<0.000000e+00> : vector<256xf32>
    %9 = vector.multi_reduction <add>, %8, %cst_1 [0] : vector<8x256xf32> to vector<256xf32>
    %10 = vector.shape_cast %9 : vector<256xf32> to vector<1x256xf32>
    %c0_2 = arith.constant 0 : index
    %c0_3 = arith.constant 0 : index
    %11 = vector.load %arg2[%c0_2, %c0_3] : memref<1x256xf32, #tpu.memory_space<vmem>>, vector<1x256xf32>
    %12 = arith.mulf %5, %11 : vector<1x256xf32>
    %c0_4 = arith.constant 0 : index
    %c0_5 = arith.constant 0 : index
    %13 = vector.load %arg3[%c0_4, %c0_5] : memref<1x256xf32, #tpu.memory_space<vmem>>, vector<1x256xf32>
    %14 = arith.mulf %10, %13 : vector<1x256xf32>
    %15 = arith.addf %12, %14 : vector<1x256xf32>
    %cst_6 = arith.constant dense<0.000000e+00> : vector<1xf32>
    %16 = vector.multi_reduction <add>, %15, %cst_6 [1] : vector<1x256xf32> to vector<1xf32>
    %17 = vector.shape_cast %16 : vector<1xf32> to vector<1x1xf32>
    %c0_7 = arith.constant 0 : index
    %c0_8 = arith.constant 0 : index
    %c0_9 = arith.constant 0 : index
    %18 = vector.load %arg4[%c0_7, %c0_8, %c0_9] : memref<1x1x1xf32, #tpu.memory_space<vmem>>, vector<1x1x1xf32>
    %19 = vector.shape_cast %18 : vector<1x1x1xf32> to vector<1x1xf32>
    %20 = vector.shape_cast %17 : vector<1x1xf32> to vector<1x1x1xf32>
    tpu.vector_store %arg4[%c0_7, %c0_8, %c0_9], %20 {strides = array<i32>} : memref<1x1x1xf32, #tpu.memory_space<vmem>>, vector<1x1x1xf32>,
    return
  }
  func.func @transform_0(%arg0: i32) -> (i32, i32) {
    %c0_i32 = arith.constant 0 : i32
    %c0_i32_0 = arith.constant 0 : i32
    return %arg0, %c0_i32 : i32, i32
  }
  func.func @transform_1(%arg0: i32) -> (i32, i32) {
    %c0_i32 = arith.constant 0 : i32
    %c0_i32_0 = arith.constant 0 : i32
    %c0_i32_1 = arith.constant 0 : i32
    return %c0_i32, %c0_i32_0 : i32, i32
  }
  func.func @transform_2(%arg0: i32) -> (i32, i32) {
    %c0_i32 = arith.constant 0 : i32
    %c0_i32_0 = arith.constant 0 : i32
    %c0_i32_1 = arith.constant 0 : i32
    return %c0_i32, %c0_i32_0 : i32, i32
  }
  func.func @transform_3(%arg0: i32) -> (i32, i32, i32) {
    %c0_i32 = arith.constant 0 : i32
    %c0_i32_0 = arith.constant 0 : i32
    %c0_i32_1 = arith.constant 0 : i32
    return %arg0, %c0_i32, %c0_i32_0 : i32, i32, i32
  }
}

</mosaic_0001>

<llo_original>
// kernel: tpu_custom_call.1
$region0: #{tpu_custom_call.1}
  #allocation0 [shape = 'u32[]', space=smem, size = 0x4, offset = 0x4, fixed_abs, tag = 'smem constant byte address 0x4 - core index']
  #allocation1 [shape = 'u32[72,128]{1,0:T(1,128)}', space=vmem, size = 0x9000, scoped, tag = 'internal scratch']
  %s0 = inlined_call_operand.hbm [shape: f32[8,256], index: 0, kind: input, shape index: {}]
  %s1 = inlined_call_operand.hbm [shape: f32[1,256], index: 1, kind: input, shape index: {}]
  %s2 = inlined_call_operand.hbm [shape: f32[1,256], index: 2, kind: input, shape index: {}]
  %s3 = inlined_call_operand.hbm [shape: f32[1,1,1], index: 3, kind: output, shape index: {}]
  %s4 = sld [smem:[#allocation0]]
  $region34: #{tpu_custom_call.1} parent=0
    _
  %s6 = ssub.s32 1, %s4
  %s7 = scalar_select 0, %s6, %s4
  $region1: #{tpu_custom_call.1} parent=0
    #allocation2 [shape = 'u8[8192]{0}', space=vmem, size = 0x2000, scoped, tag = 'input window, operand 0, single buffered']
    #allocation3 [shape = 's32[1]{0}', space=sflag, size = 0x4, scoped, tag = 'scoped memory for tpu_custom_call.1']
    #allocation4 [shape = 's32[1]{0}', space=sflag, size = 0x4, scoped, tag = 'scoped memory for tpu_custom_call.1']
    #allocation5 [shape = 'u8[1024]{0}', space=vmem, size = 0x400, scoped, tag = 'input window, operand 1, single buffered']
    #allocation6 [shape = 's32[1]{0}', space=sflag, size = 0x4, scoped, tag = 'scoped memory for tpu_custom_call.1']
    #allocation7 [shape = 'u8[1024]{0}', space=vmem, size = 0x400, scoped, tag = 'input window, operand 2, single buffered']
    #allocation8 [shape = 'u8[512]{0}', space=vmem, size = 0x400, scoped, tag = 'output window, operand 0, single buffered']
    %8 = vsyncpa [#allocation3], 0
    %9 = vsyncpa [#allocation6], 0
    %10 = vsyncpa [#allocation4], 0
    // Predicated region
    $region2: #{tpu_custom_call.1} parent=1 // pred_check
      _
    $region3: #{tpu_custom_call.1} parent=1 // pred_check_branch
      %12 = sbr.rel (0) target = $region5
    $region4: #{tpu_custom_call.1} parent=1 // pred_region
      %14 = vsyncadd [#allocation3], 0
      %s16 = sshll.u32 %s0, 4
      %s17 = int_to_ptr.hbm [resolvable:$true] %s16
      %s18 = sshll.u32 [#allocation2], 4
      %s19 = int_to_ptr.vmem [resolvable:$true] %s18
      %21 = dma.hbm_to_vmem [thread:$0]  %s17, 256, %s19, [#allocation3]
    $region5: #{tpu_custom_call.1} parent=1 // pred_fallthru
      _
    // Predicated region
    $region6: #{tpu_custom_call.1} parent=1 // pred_check
      _
    $region7: #{tpu_custom_call.1} parent=1 // pred_check_branch
      %23 = sbr.rel (0) target = $region9
    $region8: #{tpu_custom_call.1} parent=1 // pred_region
      %25 = vsyncadd [#allocation6], 0
      %s27 = sshll.u32 %s1, 4
      %s28 = int_to_ptr.hbm [resolvable:$true] %s27
      %s29 = sshll.u32 [#allocation5], 4
      %s30 = int_to_ptr.vmem [resolvable:$true] %s29
      %32 = dma.hbm_to_vmem [thread:$0]  %s28, 32, %s30, [#allocation6]
    $region9: #{tpu_custom_call.1} parent=1 // pred_fallthru
      _
    // Predicated region
    $region10: #{tpu_custom_call.1} parent=1 // pred_check
      _
    $region11: #{tpu_custom_call.1} parent=1 // pred_check_branch
      %34 = sbr.rel (0) target = $region13
    $region12: #{tpu_custom_call.1} parent=1 // pred_region
      %36 = vsyncadd [#allocation6], 0
      %s38 = sshll.u32 %s2, 4
      %s39 = int_to_ptr.hbm [resolvable:$true] %s38
      %s40 = sshll.u32 [#allocation7], 4
      %s41 = int_to_ptr.vmem [resolvable:$true] %s40
      %43 = dma.hbm_to_vmem [thread:$0]  %s39, 32, %s41, [#allocation6]
    $region13: #{tpu_custom_call.1} parent=1 // pred_fallthru
      _
    // Predicated region
    $region14: #{tpu_custom_call.1} parent=1 // pred_check
      _
    $region15: #{tpu_custom_call.1} parent=1 // pred_check_branch
      %45 = sbr.rel (0) target = $region17
    $region16: #{tpu_custom_call.1} parent=1 // pred_region
      %47 = dma.done [#allocation3], 256
    $region17: #{tpu_custom_call.1} parent=1 // pred_fallthru
      _
    // Predicated region
    $region18: #{tpu_custom_call.1} parent=1 // pred_check
      _
    $region19: #{tpu_custom_call.1} parent=1 // pred_check_branch
      %49 = sbr.rel (0) target = $region21
    $region20: #{tpu_custom_call.1} parent=1 // pred_region
      %51 = dma.done [#allocation6], 32
    $region21: #{tpu_custom_call.1} parent=1 // pred_fallthru
      _
    // Predicated region
    $region22: #{tpu_custom_call.1} parent=1 // pred_check
      _
    $region23: #{tpu_custom_call.1} parent=1 // pred_check_branch
      %53 = sbr.rel (0) target = $region25
    $region24: #{tpu_custom_call.1} parent=1 // pred_region
      %55 = dma.done [#allocation6], 32
    $region25: #{tpu_custom_call.1} parent=1 // pred_fallthru
      _
    %v56 = vld [vmem:[#allocation2] sm:$0xff]
    %v57 = vld [vmem:[#allocation2 + $0x8] sm:$0xff]
    %58 = vrot.lane.b32.xlu0 %v56, 112
    %v59 = vpop.permute.xlu0 %58
    %60 = vrot.lane.b32.xlu0 %v57, 112
    %v61 = vpop.permute.xlu0 %60
    %v62 = vlaneseq
    %v63 = vand.u32 %v62, 127
    %vm64 = vcmp.lt.s32.totalorder %v63, 112
    %v65 = vsel %vm64, %v59, %v61
    %v66 = vsel %vm64, %v61, %v59
    %v67 = vsub.f32 %v65, %v56
    %v68 = vsub.f32 %v66, %v57
    %v69 = vmul.f32 %v67, %v67
    %v70 = vmul.f32 %v68, %v68
    %v71 = vrot.slane %v69, 4
    %v72 = vadd.f32 %v69, %v71
    %v73 = vrot.slane %v72, 2
    %v74 = vadd.f32 %v72, %v73
    %v75 = vrot.slane %v74, 1
    %v76 = vadd.f32 %v74, %v75
    %v77 = vrot.slane %v70, 4
    %v78 = vadd.f32 %v70, %v77
    %v79 = vrot.slane %v78, 2
    %v80 = vadd.f32 %v78, %v79
    %v81 = vrot.slane %v80, 1
    %v82 = vadd.f32 %v80, %v81
    %83 = vrot.lane.b32.xlu0 %v56, 127
    %v84 = vpop.permute.xlu0 %83
    %85 = vrot.lane.b32.xlu0 %v57, 127
    %v86 = vpop.permute.xlu0 %85
    %vm87 = vcmp.lt.s32.totalorder %v63, 127
    %v88 = vsel %vm87, %v84, %v86
    %v89 = vsel %vm87, %v86, %v84
    %v90 = vsub.f32 %v88, %v56
    %v91 = vsub.f32 %v89, %v57
    %v92 = vmul.f32 %v90, %v90
    %v93 = vmul.f32 %v91, %v91
    %v94 = vrot.slane %v92, 4
    %v95 = vadd.f32 %v92, %v94
    %v96 = vrot.slane %v95, 2
    %v97 = vadd.f32 %v95, %v96
    %v98 = vrot.slane %v97, 1
    %v99 = vadd.f32 %v97, %v98
    %v100 = vrot.slane %v93, 4
    %v101 = vadd.f32 %v93, %v100
    %v102 = vrot.slane %v101, 2
    %v103 = vadd.f32 %v101, %v102
    %v104 = vrot.slane %v103, 1
    %v105 = vadd.f32 %v103, %v104
    %v106 = vld [vmem:[#allocation5] sm:$0x3]
    %v108 = vperm.slane %v106, 0
    %v109 = vperm.slane %v106, 1
    %v112 = vmul.f32 %v76, %v108
    %v113 = vmul.f32 %v82, %v109
    %v114 = vld [vmem:[#allocation7] sm:$0x3]
    %v116 = vperm.slane %v114, 0
    %v117 = vperm.slane %v114, 1
    %v120 = vmul.f32 %v99, %v116
    %v121 = vmul.f32 %v105, %v117
    %v122 = vadd.f32 %v112, %v120
    %v123 = vadd.f32 %v113, %v121
    %vm124 = vcmask 1040384
    %v125 = vsel %vm124, %v122, 0.0
    %v126 = vsel %vm124, %v123, 0.0
    %v127 = vadd.f32 %v125, %v126
    %128 = vadd.xlane.f32.xlu0 %v127
    %v129 = vpop.xlane.xlu0 %128
    %vm130 = vcmask 0
    %131 = vst.msk [vmem:[#allocation8] sm:$0x1] %vm130, %v129
    // Predicated region
    $region26: #{tpu_custom_call.1} parent=1 // pred_check
      _
    $region27: #{tpu_custom_call.1} parent=1 // pred_check_branch
      %133 = sbr.rel (0) target = $region29
    $region28: #{tpu_custom_call.1} parent=1 // pred_region
      %135 = vsyncadd [#allocation4], 0
      %s137 = sshll.u32 [#allocation8], 4
      %s138 = int_to_ptr.vmem [resolvable:$true] %s137
      %s139 = sshll.u32 %s3, 4
      %s140 = int_to_ptr.hbm [resolvable:$true] %s139
      %142 = dma.vmem_to_hbm [thread:$0]  %s138, 16, %s140, [#allocation4]
    $region29: #{tpu_custom_call.1} parent=1 // pred_fallthru
      _
    // Predicated region
    $region30: #{tpu_custom_call.1} parent=1 // pred_check
      _
    $region31: #{tpu_custom_call.1} parent=1 // pred_check_branch
      %144 = sbr.rel (0) target = $region33
    $region32: #{tpu_custom_call.1} parent=1 // pred_region
      %146 = dma.done [#allocation4], 16
    $region33: #{tpu_custom_call.1} parent=1 // pred_fallthru
      _
    %147 = vsyncpa [#allocation3], 1
    %148 = vsyncpa [#allocation6], 1
    %149 = vsyncpa [#allocation4], 1

</llo_original>
